<compile_context>
chip_gen: v5e
topology: v5e:2x2
jax: 0.10.0
libtpu: 0.0.40
codegen_flags: <defaults>
</compile_context>

<pallas_src>
import jax
import jax.numpy as jnp
from jax import lax
from jax.experimental import pallas as pl
from jax.experimental.pallas import tpu as pltpu


def _round_up(n, m):
    return ((n + m - 1) // m) * m


def _adf1_kernel(b_ref, x_ref, w_ref, o_ref):
    # b_ref : SMEM (2,)  f32   bias (two scalars)
    # x_ref : VMEM (T, N)      activations tile (f32 or bf16)
    # w_ref : VMEM (2, N)      weight in natural lane-dense layout (invariant)
    # o_ref : VMEM (T, 2) f32  softmax probabilities
    x = x_ref[...]
    w = w_ref[...]

    # x @ W.T on the MXU, always accumulating in f32 (bf16 inputs supported).
    z = lax.dot_general(
        x, w,
        dimension_numbers=(((1,), (1,)), ((), ())),
        preferred_element_type=jnp.float32,
    )                                                     # (T, 2)

    z0 = z[:, 0:1] + b_ref[0]
    z1 = z[:, 1:2] + b_ref[1]

    # LeakyReLU, negative_slope = 0.01 (PyTorch default).
    a0 = jnp.where(z0 >= 0, z0, 0.01 * z0)
    a1 = jnp.where(z1 >= 0, z1, 0.01 * z1)

    # 2-class softmax == sigmoid of the logit difference (exact):
    #   p1 = exp(a1) / (exp(a0) + exp(a1)) = 1 / (1 + exp(a0 - a1))
    # Saturates cleanly to 0/1 for large |a0 - a1|; no cross-lane reductions.
    p1 = 1.0 / (1.0 + jnp.exp(a0 - a1))

    # Single store of both probability columns.
    o_ref[...] = jnp.concatenate([1.0 - p1, p1], axis=-1).astype(o_ref.dtype)


def adf1_forward(x, w, b, *, tile_b=None, vmem_limit_bytes=None):
    """softmax(leaky_relu(x @ w.T + b), axis=1).

    x: (B, n_adf) f32 or bf16; w: (2, n_adf); b: (2,) -> (B, 2) f32.
    """
    B, n_adf = x.shape
    assert w.shape == (2, n_adf) and b.shape == (2,)

    w = w.astype(x.dtype)               # matmul dtype follows activations
    b_f32 = b.astype(jnp.float32)

    itemsize = jnp.dtype(x.dtype).itemsize
    # Sublane multiple: 8 rows for f32, 16 for bf16, 32 for int8/fp8.
    sublane = max(8, 32 // itemsize)

    # Generation-aware scoped-VMEM budget: ~3/4 of physical VMEM, capped at
    # 96 MiB (=> ~48 MiB on v7x's 64 MiB per-TC VMEM, 96 MiB on v5e/v6e).
    if vmem_limit_bytes is None:
        try:
            cap = getattr(pltpu.get_tpu_info(), "vmem_capacity_bytes",
                          64 * 1024 * 1024)
        except Exception:
            cap = 64 * 1024 * 1024
        vmem_limit_bytes = min(int(cap * 3 // 4), 96 * 1024 * 1024)

    # VMEM budget for the double-buffered x tile: subtract the (sublane x
    # lane-padded) weight buffer and some Mosaic-internal headroom, then
    # account per-row for 2x x-tile bytes + 2x (lane-padded) f32 out bytes.
    w_bytes = 8 * _round_up(n_adf, 128) * itemsize
    headroom = 4 * 1024 * 1024
    budget = max(1 << 20, vmem_limit_bytes - w_bytes - headroom)
    bytes_per_row = 2 * n_adf * itemsize + 2 * 128 * 4
    max_rows = max(sublane, budget // bytes_per_row)

    if tile_b is None:
        tb = max_rows
        # Keep >= ~8 grid steps when B allows: deep pipeline + both v7x TCs.
        tb = min(tb, _round_up(pl.cdiv(B, 8), sublane))
    else:
        tb = min(tile_b, max_rows)
    tb = max(sublane, (tb // sublane) * sublane)

    grid = (pl.cdiv(B, tb),)            # partial last block handled by Pallas

    return pl.pallas_call(
        _adf1_kernel,
        out_shape=jax.ShapeDtypeStruct((B, 2), jnp.float32),
        grid=grid,
        in_specs=[
            pl.BlockSpec(memory_space=pltpu.MemorySpace.SMEM),   # bias (2,)
            pl.BlockSpec((tb, n_adf), lambda i: (i, 0)),         # x batch tiles
            pl.BlockSpec((2, n_adf), lambda i: (0, 0)),          # W (invariant)
        ],
        out_specs=pl.BlockSpec((tb, 2), lambda i: (i, 0)),
        compiler_params=pltpu.CompilerParams(
            dimension_semantics=("parallel",),   # shard tiles across TCs (v7x)
            vmem_limit_bytes=vmem_limit_bytes,
        ),
    )(b_f32, x, w)


def _reference(x, w, b):
    z = x.astype(jnp.float32) @ w.astype(jnp.float32).T + b.astype(jnp.float32)
    z = jnp.where(z >= 0, z, 0.01 * z)
    return jax.nn.softmax(z, axis=1)


if __name__ == "__main__":
    key = jax.random.PRNGKey(0)
    k_x, k_w, k_b = jax.random.split(key, 3)

    batch = 300          # deliberately NOT a multiple of the tile -> masked tail
    n_adf = 64

    x = jax.random.normal(k_x, (batch, n_adf), dtype=jnp.float32)
    # Deterministic param init (uniform +-1/sqrt(n_adf), like nn.Linear default)
    bound = 1.0 / (n_adf ** 0.5)
    w = jax.random.uniform(k_w, (2, n_adf), minval=-bound, maxval=bound,
                           dtype=jnp.float32)
    b = jax.random.uniform(k_b, (2,), minval=-bound, maxval=bound,
                           dtype=jnp.float32)

    ref = _reference(x, w, b)

    # 1) explicit tile, partial last block (no jnp.pad anywhere)
    out = jax.block_until_ready(adf1_forward(x, w, b, tile_b=128))
    assert out.shape == (batch, 2)
    assert jnp.allclose(out, ref, atol=1e-5, rtol=1e-5), "f32 mismatch"

    # 2) auto-sized tile (VMEM-budget / min-tiles path)
    out_auto = jax.block_until_ready(adf1_forward(x, w, b))
    assert jnp.allclose(out_auto, ref, atol=1e-5, rtol=1e-5), "auto-tile mismatch"

    # 3) bf16 activations/weights (half HBM traffic), f32 MXU accumulate
    x_bf = x.astype(jnp.bfloat16)
    w_bf = w.astype(jnp.bfloat16)
    out_bf = jax.block_until_ready(adf1_forward(x_bf, w_bf, b, tile_b=128))
    ref_bf = _reference(x_bf.astype(jnp.float32), w_bf.astype(jnp.float32), b)
    assert jnp.allclose(out_bf, ref_bf, atol=1e-2, rtol=1e-2), "bf16 mismatch"

    print("KERNEL_OK")
</pallas_src>

<mosaic_0001>
module attributes {stable_mosaic.version = 11 : i64} {
  func.func @_adf1_kernel(%arg0: i32, %arg1: memref<2xf32, #tpu.memory_space<smem>>, %arg2: memref<128x64xf32, #tpu.memory_space<vmem>>, %arg3: memref<2x64xf32, #tpu.memory_space<vmem>>, %arg4: memref<128x2xf32, #tpu.memory_space<vmem>>) attributes {dimension_semantics = [#tpu.dimension_semantics<parallel>], iteration_bounds = array<i64: 3>, scalar_prefetch = 0 : i64, scratch_operands = 0 : i64, tpu.core_type = #tpu.core_type<tc>, window_params = [{transform_indices = @transform_0, window_bounds = array<i64: 2>}, {transform_indices = @transform_1, window_bounds = array<i64: 128, 64>}, {pipeline_mode = #tpu.pipeline_mode<synchronous>, transform_indices = @transform_2, window_bounds = array<i64: 2, 64>}, {transform_indices = @transform_3, window_bounds = array<i64: 128, 2>}]} {
    %c0 = arith.constant 0 : index
    %c0_0 = arith.constant 0 : index
    %0 = vector.load %arg2[%c0, %c0_0] : memref<128x64xf32, #tpu.memory_space<vmem>>, vector<128x64xf32>
    %c0_1 = arith.constant 0 : index
    %c0_2 = arith.constant 0 : index
    %1 = vector.load %arg3[%c0_1, %c0_2] : memref<2x64xf32, #tpu.memory_space<vmem>>, vector<2x64xf32>
    %cst = arith.constant dense<0.000000e+00> : vector<128x2xf32>
    %2 = tpu.matmul %0, %1, %cst {dimension_numbers = #tpu.dot_dimension_numbers<[1], [1], [0], [0], [0, 0, 1, 0], [], []>} : vector<128x64xf32>, vector<2x64xf32>, vector<128x2xf32> -> vector<128x2xf32>
    %3 = vector.extract_strided_slice %2 {offsets = [0, 0], sizes = [128, 1], strides = [1, 1]} : vector<128x2xf32> to vector<128x1xf32>
    %c0_3 = arith.constant 0 : index
    %4 = memref.load %arg1[%c0_3] : memref<2xf32, #tpu.memory_space<smem>>
    %5 = vector.broadcast %4 : f32 to vector<128x1xf32>
    %6 = arith.addf %3, %5 : vector<128x1xf32>
    %7 = vector.extract_strided_slice %2 {offsets = [0, 1], sizes = [128, 1], strides = [1, 1]} : vector<128x2xf32> to vector<128x1xf32>
    %c1 = arith.constant 1 : index
    %8 = memref.load %arg1[%c1] : memref<2xf32, #tpu.memory_space<smem>>
    %9 = vector.broadcast %8 : f32 to vector<128x1xf32>
    %10 = arith.addf %7, %9 : vector<128x1xf32>
    %cst_4 = arith.constant 0.000000e+00 : f32
    %11 = vector.broadcast %cst_4 : f32 to vector<128x1xf32>
    %12 = arith.cmpf oge, %6, %11 : vector<128x1xf32>
    %cst_5 = arith.constant 0.00999999977 : f32
    %13 = vector.broadcast %cst_5 : f32 to vector<128x1xf32>
    %14 = arith.mulf %13, %6 : vector<128x1xf32>
    %15 = arith.select %12, %6, %14 : vector<128x1xi1>, vector<128x1xf32>
    %cst_6 = arith.constant 0.000000e+00 : f32
    %16 = vector.broadcast %cst_6 : f32 to vector<128x1xf32>
    %17 = arith.cmpf oge, %10, %16 : vector<128x1xf32>
    %cst_7 = arith.constant 0.00999999977 : f32
    %18 = vector.broadcast %cst_7 : f32 to vector<128x1xf32>
    %19 = arith.mulf %18, %10 : vector<128x1xf32>
    %20 = arith.select %17, %10, %19 : vector<128x1xi1>, vector<128x1xf32>
    %21 = arith.subf %15, %20 : vector<128x1xf32>
    %22 = math.exp %21 : vector<128x1xf32>
    %cst_8 = arith.constant 1.000000e+00 : f32
    %23 = vector.broadcast %cst_8 : f32 to vector<128x1xf32>
    %24 = arith.addf %23, %22 : vector<128x1xf32>
    %cst_9 = arith.constant 1.000000e+00 : f32
    %25 = vector.broadcast %cst_9 : f32 to vector<128x1xf32>
    %26 = arith.divf %25, %24 : vector<128x1xf32>
    %cst_10 = arith.constant 1.000000e+00 : f32
    %27 = vector.broadcast %cst_10 : f32 to vector<128x1xf32>
    %28 = arith.subf %27, %26 : vector<128x1xf32>
    %29 = tpu.concatenate %28, %26 in 1 : vector<128x1xf32>, vector<128x1xf32> -> vector<128x2xf32>
    %c0_11 = arith.constant 0 : index
    %c0_12 = arith.constant 0 : index
    %30 = vector.load %arg4[%c0_11, %c0_12] : memref<128x2xf32, #tpu.memory_space<vmem>>, vector<128x2xf32>
    tpu.vector_store %arg4[%c0_11, %c0_12], %29 {strides = array<i32>} : memref<128x2xf32, #tpu.memory_space<vmem>>, vector<128x2xf32>,
    return
  }
  func.func @transform_0(%arg0: i32) -> i32 {
    %c0_i32 = arith.constant 0 : i32
    %c0_i32_0 = arith.constant 0 : i32
    return %c0_i32 : i32
  }
  func.func @transform_1(%arg0: i32) -> (i32, i32) {
    %c0_i32 = arith.constant 0 : i32
    %c0_i32_0 = arith.constant 0 : i32
    return %arg0, %c0_i32 : i32, i32
  }
  func.func @transform_2(%arg0: i32) -> (i32, i32) {
    %c0_i32 = arith.constant 0 : i32
    %c0_i32_0 = arith.constant 0 : i32
    %c0_i32_1 = arith.constant 0 : i32
    return %c0_i32, %c0_i32_0 : i32, i32
  }
  func.func @transform_3(%arg0: i32) -> (i32, i32) {
    %c0_i32 = arith.constant 0 : i32
    %c0_i32_0 = arith.constant 0 : i32
    return %arg0, %c0_i32 : i32, i32
  }
}

</mosaic_0001>

<llo_original>
// kernel: tpu_custom_call.1
$region0: #{tpu_custom_call.1}
  #allocation0 [shape = 'u32[]', space=smem, size = 0x4, offset = 0x4, fixed_abs, tag = 'smem constant byte address 0x4 - core index']
  #allocation1 [shape = 'u32[72,128]{1,0:T(1,128)}', space=vmem, size = 0x9000, scoped, tag = 'internal scratch']
  %s0 = inlined_call_operand.vmem [shape: f32[2], index: 0, kind: input, shape index: {}]
  %s1 = inlined_call_operand.vmem [shape: f32[300,64], index: 1, kind: input, shape index: {}]
  %s2 = inlined_call_operand.vmem [shape: f32[2,64], index: 2, kind: input, shape index: {}]
  %s3 = inlined_call_operand.vmem [shape: f32[300,2], index: 3, kind: output, shape index: {}]
  %s4 = sld [smem:[#allocation0]]
  $region97: #{tpu_custom_call.1} parent=0
    _
  %s6 = ssub.s32 1, %s4
  %s7 = scalar_select 0, %s6, %s4
  $region1: #{tpu_custom_call.1} parent=0
    #allocation2 [shape = 'u8[512]{0}', space=smem, size = 0x200, scoped, tag = 'input window, operand 0, single buffered']
    #allocation3 [shape = 's32[2]{0}', space=sflag, size = 0x8, scoped, tag = 'scoped memory for tpu_custom_call.1']
    #allocation4 [shape = 'u8[131072]{0}', space=vmem, size = 0x20000, scoped, tag = 'output window, operand 0']
    %8 = vsyncpa [#allocation3], 0
    loop: start=0, step=1, limit=5
    $region2: #{tpu_custom_call.1} parent=1 // loop_pre_header
      _
    $region3: #{tpu_custom_call.1} parent=1 // loop_header
      %s10 = sphi 0, %s14
      %p11 = scmp.ge.s32.totalorder %s10, 5
      %s18 = sphi 0, %s18
      %s20 = sphi 0, %s18
      %s21 = sphi 0, %s20
      %s35 = sphi 0, %s21
      %s41 = sphi 0, %s43
      %s44 = sphi 0, %s41
      %s45 = sphi 0, %s44
      %s61 = sphi 0, %s45
      %s65 = sphi 0, %s65
      %s67 = sphi 0, %s65
      %s68 = sphi 0, %s67
      %s82 = sphi 0, %s68
      %s88 = sphi 0, %s90
      %s91 = sphi 0, %s88
      %s92 = sphi 0, %s91
      %s108 = sphi 0, %s92
    $region4: #{tpu_custom_call.1} parent=1 // loop_header_branch
      %13 = sbr.rel (%p11) target = $region8
    $region5: #{tpu_custom_call.1} parent=1 // loop_body
      %s15 = ssub.s32 %s10, 1
      %s16 = ssub.s32 %s10, 2
      %s17 = sadd.s32 %s10, 1
      %s19 = sadd.s32 %s18, 1
      %p22 = scmp.eq.s32.totalorder %s10, 2
      %p23 = scmp.ne.s32.totalorder %s18, %s20
      %p24 = scmp.eq.s32.totalorder %s10, 0
      %p25 = por %p23, %p24
      %p26 = scmp.ne.s32.totalorder %s18, %s20
      %p27 = scmp.eq.s32.totalorder %s15, 2
      %p28 = por %p26, %p27
      %p29 = scmp.ne.s32.totalorder %s20, %s21
      %p30 = scmp.eq.s32.totalorder %s15, 0
      %p31 = por %p29, %p30
      %p32 = scmp.ne.s32.totalorder %s20, %s21
      %p33 = scmp.eq.s32.totalorder %s16, 2
      %p34 = por %p32, %p33
      %p36 = scmp.ne.s32.totalorder %s21, %s35
      %p37 = scmp.eq.s32.totalorder %s16, 0
      %p38 = por %p36, %p37
      %s39 = ssub.s32 %s10, %s17
      %p40 = scmp.eq.s32.totalorder %s39, 0
      %s42 = sadd.s32 %s41, 1
      %s43 = scalar_select %p40, %s41, %s42
      %p46 = pneg %p40
      %p47 = scmp.eq.s32.totalorder %s10, 2
      %p48 = por %p46, %p47
      %p49 = scmp.ne.s32.totalorder %s41, %s44
      %p50 = scmp.eq.s32.totalorder %s10, 0
      %p51 = por %p49, %p50
      %p52 = scmp.ne.s32.totalorder %s41, %s44
      %p53 = scmp.eq.s32.totalorder %s15, 2
      %p54 = por %p52, %p53
      %p55 = scmp.ne.s32.totalorder %s44, %s45
      %p56 = scmp.eq.s32.totalorder %s15, 0
      %p57 = por %p55, %p56
      %p58 = scmp.ne.s32.totalorder %s44, %s45
      %p59 = scmp.eq.s32.totalorder %s16, 2
      %p60 = por %p58, %p59
      %p62 = scmp.ne.s32.totalorder %s45, %s61
      %p63 = scmp.eq.s32.totalorder %s16, 0
      %p64 = por %p62, %p63
      %s66 = sadd.s32 %s65, 1
      %p69 = scmp.eq.s32.totalorder %s10, 2
      %p70 = scmp.ne.s32.totalorder %s65, %s67
      %p71 = scmp.eq.s32.totalorder %s10, 0
      %p72 = por %p70, %p71
      %p73 = scmp.ne.s32.totalorder %s65, %s67
      %p74 = scmp.eq.s32.totalorder %s15, 2
      %p75 = por %p73, %p74
      %p76 = scmp.ne.s32.totalorder %s67, %s68
      %p77 = scmp.eq.s32.totalorder %s15, 0
      %p78 = por %p76, %p77
      %p79 = scmp.ne.s32.totalorder %s67, %s68
      %p80 = scmp.eq.s32.totalorder %s16, 2
      %p81 = por %p79, %p80
      %p83 = scmp.ne.s32.totalorder %s68, %s82
      %p84 = scmp.eq.s32.totalorder %s16, 0
      %p85 = por %p83, %p84
      %s86 = ssub.s32 %s10, %s17
      %p87 = scmp.eq.s32.totalorder %s86, 0
      %s89 = sadd.s32 %s88, 1
      %s90 = scalar_select %p87, %s88, %s89
      %p93 = pneg %p87
      %p94 = scmp.eq.s32.totalorder %s10, 2
      %p95 = por %p93, %p94
      %p96 = scmp.ne.s32.totalorder %s88, %s91
      %p97 = scmp.eq.s32.totalorder %s10, 0
      %p98 = por %p96, %p97
      %p99 = scmp.ne.s32.totalorder %s88, %s91
      %p100 = scmp.eq.s32.totalorder %s15, 2
      %p101 = por %p99, %p100
      %p102 = scmp.ne.s32.totalorder %s91, %s92
      %p103 = scmp.eq.s32.totalorder %s15, 0
      %p104 = por %p102, %p103
      %p105 = scmp.ne.s32.totalorder %s91, %s92
      %p106 = scmp.eq.s32.totalorder %s16, 2
      %p107 = por %p105, %p106
      %p109 = scmp.ne.s32.totalorder %s92, %s108
      %p110 = scmp.eq.s32.totalorder %s16, 0
      %p111 = por %p109, %p110
      %p112 = scmp.le.s32.totalorder 1, %s10
      %p113 = scmp.lt.s32.totalorder %s10, 4
      %p114 = pnand %p112, %p113
      %p115 = pneg %p114
      // Predicated region
      $region9: #{tpu_custom_call.1} parent=5 // pred_check
        _
      $region10: #{tpu_custom_call.1} parent=5 // pred_check_branch
        %117 = sbr.rel (%p114) target = $region12
      $region11: #{tpu_custom_call.1} parent=5 // pred_region
        %s118 = ssub.s32 %s10, 1
        // Predicated region
        $region13: #{tpu_custom_call.1} parent=11 // pred_check
          %p119 = pneg %p31
        $region14: #{tpu_custom_call.1} parent=11 // pred_check_branch
          %121 = sbr.rel (%p119) target = $region16
        $region15: #{tpu_custom_call.1} parent=11 // pred_region
          %123 = vsyncadd [#allocation3], 0
          %s125 = sshll.u32 %s0, 4
          %s126 = int_to_ptr.vmem [resolvable:$true] %s125
          %128 = dma.vmem_to_smem %s126, 16, [#allocation2], [#allocation3]
        $region16: #{tpu_custom_call.1} parent=11 // pred_fallthru
          _
        // Predicated region
        $region17: #{tpu_custom_call.1} parent=11 // pred_check
          %p129 = pneg %p78
        $region18: #{tpu_custom_call.1} parent=11 // pred_check_branch
          %131 = sbr.rel (%p129) target = $region20
        $region19: #{tpu_custom_call.1} parent=11 // pred_region
          _
        $region20: #{tpu_custom_call.1} parent=11 // pred_fallthru
          _
      $region12: #{tpu_custom_call.1} parent=5 // pred_fallthru
        _
      %p132 = scmp.lt.s32.totalorder %s10, 3
      // Predicated region
      $region21: #{tpu_custom_call.1} parent=5 // pred_check
        %p133 = pneg %p132
      $region22: #{tpu_custom_call.1} parent=5 // pred_check_branch
        %135 = sbr.rel (%p133) target = $region24
      $region23: #{tpu_custom_call.1} parent=5 // pred_region
        // Predicated region
        $region25: #{tpu_custom_call.1} parent=23 // pred_check
          %p136 = pneg %p51
        $region26: #{tpu_custom_call.1} parent=23 // pred_check_branch
          %138 = sbr.rel (%p136) target = $region28
        $region27: #{tpu_custom_call.1} parent=23 // pred_region
          %s139 = smul.u32 16, %s10
          %s140 = ssub.s32 38, %s139
          %p141 = scmp.lt.s32.totalorder %s140, 16
          %s142 = scalar_select %p141, %s140, 16
          %s143 = smul.u32 8, %s142
          %p144 = scmp.lt.s32.totalorder %s139, 37
          %s145 = scalar_select %p144, %s139, 37
          %s146 = smul.addr %s145, 8
          %s147 = scalar_lea.vmem %s1, %s146
          %s148 = smul.u32 16, %s10
          %s149 = ssub.s32 38, %s148
          %p150 = scmp.lt.s32.totalorder %s149, 16
          %s151 = scalar_select %p150, %s149, 16
          %s152 = smul.u32 8, %s151
        $region28: #{tpu_custom_call.1} parent=23 // pred_fallthru
          _
      $region24: #{tpu_custom_call.1} parent=5 // pred_fallthru
        _
      %p153 = scmp.le.s32.totalorder 1, %s10
      %p154 = scmp.lt.s32.totalorder %s10, 4
      %p155 = pnand %p153, %p154
      %p156 = pneg %p155
      // Predicated region
      $region29: #{tpu_custom_call.1} parent=5 // pred_check
        _
      $region30: #{tpu_custom_call.1} parent=5 // pred_check_branch
        %158 = sbr.rel (%p155) target = $region32
      $region31: #{tpu_custom_call.1} parent=5 // pred_region
        %s159 = ssub.s32 %s10, 1
        // Predicated region
        $region33: #{tpu_custom_call.1} parent=31 // pred_check
          %p160 = pneg %p31
        $region34: #{tpu_custom_call.1} parent=31 // pred_check_branch
          %162 = sbr.rel (%p160) target = $region36
        $region35: #{tpu_custom_call.1} parent=31 // pred_region
          %164 = dma.done [#allocation3], 16
        $region36: #{tpu_custom_call.1} parent=31 // pred_fallthru
          _
        %165 = sfence
        %p166 = pneg %p31
        %p167 = pneg %p28
        %s168 = smul.u32 16, %s15
        %s169 = ssub.s32 38, %s168
        %p170 = scmp.lt.s32.totalorder %s169, 16
        %s171 = scalar_select %p170, %s169, 16
        %s172 = smul.u32 8, %s171
        %p173 = scmp.lt.s32.totalorder %s168, 37
        %s174 = scalar_select %p173, %s168, 37
        %s175 = smul.addr %s174, 8
        %s176 = scalar_lea.vmem %s1, %s175
        %p177 = pneg %p57
        %p178 = pneg %p54
        %p179 = pneg %p78
        %p180 = pneg %p75
        %p181 = pneg %p104
        %p182 = pneg %p101
        %s183 = sand.u32 %s91, 1
        %s184 = sand.u32 %s91, 1
        %s185 = smul.addr %s184, 128
        %s186 = scalar_lea.vmem [#allocation4], %s185
        %s187 = smul.u32 16, %s15
        %s188 = ssub.s32 38, %s187
        %p189 = scmp.lt.s32.totalorder %s188, 16
        %s190 = scalar_select %p189, %s188, 16
        %s191 = smul.u32 8, %s190
        %p192 = scmp.lt.s32.totalorder %s187, 37
        %s193 = scalar_select %p192, %s187, 37
        %s194 = smul.addr %s193, 8
        %s195 = scalar_lea.vmem %s1, %s194
        %s196 = smul.u32 16, %s15
        %s197 = ssub.s32 38, %s196
        %p198 = scmp.lt.s32.totalorder %s197, 16
        %s199 = scalar_select %p198, %s197, 16
        %s200 = smul.u32 8, %s199
        %s201 = smul.u32 16, %s15
        %s202 = ssub.s32 38, %s201
        %p203 = scmp.lt.s32.totalorder %s202, 16
        %s204 = scalar_select %p203, %s202, 16
        %s205 = smul.u32 8, %s204
        %v206 = vld [vmem:[%s195] sm:$0xff]
        %v207 = vld [vmem:[%s195 + $0x8] sm:$0xff]
        %v208 = vld [vmem:[%s195 + $0x10] sm:$0xff]
        %v209 = vld [vmem:[%s195 + $0x18] sm:$0xff]
        %v210 = vld [vmem:[%s195 + $0x20] sm:$0xff]
        %v211 = vld [vmem:[%s195 + $0x28] sm:$0xff]
        %v212 = vld [vmem:[%s195 + $0x30] sm:$0xff]
        %v213 = vld [vmem:[%s195 + $0x38] sm:$0xff]
        %v214 = vld [vmem:[%s195 + $0x40] sm:$0xff]
        %v215 = vld [vmem:[%s195 + $0x48] sm:$0xff]
        %v216 = vld [vmem:[%s195 + $0x50] sm:$0xff]
        %v217 = vld [vmem:[%s195 + $0x58] sm:$0xff]
        %v218 = vld [vmem:[%s195 + $0x60] sm:$0xff]
        %v219 = vld [vmem:[%s195 + $0x68] sm:$0xff]
        %v220 = vld [vmem:[%s195 + $0x70] sm:$0xff]
        %v221 = vld [vmem:[%s195 + $0x78] sm:$0xff]
        %v222 = vld [vmem:[%s2] sm:$0x3]
        %vm223 = vcmask 523264
        %v225 = vsel %vm223, %v206, 0
        %v228 = vsel %vm223, %v207, 0
        %v231 = vsel %vm223, %v208, 0
        %v234 = vsel %vm223, %v209, 0
        %v237 = vsel %vm223, %v210, 0
        %v240 = vsel %vm223, %v211, 0
        %v243 = vsel %vm223, %v212, 0
        %v246 = vsel %vm223, %v213, 0
        %v249 = vsel %vm223, %v214, 0
        %v252 = vsel %vm223, %v215, 0
        %v255 = vsel %vm223, %v216, 0
        %v258 = vsel %vm223, %v217, 0
        %v261 = vsel %vm223, %v218, 0
        %v264 = vsel %vm223, %v219, 0
        %v267 = vsel %vm223, %v220, 0
        %v270 = vsel %vm223, %v221, 0
        %v273 = vsel %vm223, %v222, 0
        %275 = vmatpush.xpose.msra.mxu0 0.0
        %276 = vmatpush.xpose.msra.mxu0 0.0
        %277 = vmatpush.xpose.msra.mxu0 0.0
        %278 = vmatpush.xpose.msra.mxu0 0.0
        %279 = vmatpush.xpose.msra.mxu0 0.0
        %280 = vmatpush.xpose.msra.mxu0 0.0
        %281 = vmatpush.xpose.msra.mxu0 0.0
        %282 = vmatpush.xpose.msra.mxu0 0.0
        %283 = vmatpush.xpose.msra.mxu0 0.0
        %284 = vmatpush.xpose.msra.mxu0 0.0
        %285 = vmatpush.xpose.msra.mxu0 0.0
        %286 = vmatpush.xpose.msra.mxu0 0.0
        %287 = vmatpush.xpose.msra.mxu0 0.0
        %288 = vmatpush.xpose.msra.mxu0 0.0
        %289 = vmatpush.xpose.msra.mxu0 0.0
        %290 = vmatpush.xpose.msra.mxu0 %v273
        %291 = vmatmul.f32.gmra.mxu0 %v225
        %v292 = vpop.f32.mrf.mxu0
        %v293 = vadd.f32 0.0, %v292
        %294 = vmatmul.f32.gmra.mxu0 %v228
        %v295 = vpop.f32.mrf.mxu0
        %v296 = vadd.f32 0.0, %v295
        %297 = vmatmul.f32.gmra.mxu0 %v231
        %v298 = vpop.f32.mrf.mxu0
        %v299 = vadd.f32 0.0, %v298
        %300 = vmatmul.f32.gmra.mxu0 %v234
        %v301 = vpop.f32.mrf.mxu0
        %v302 = vadd.f32 0.0, %v301
        %303 = vmatmul.f32.gmra.mxu0 %v237
        %v304 = vpop.f32.mrf.mxu0
        %v305 = vadd.f32 0.0, %v304
        %306 = vmatmul.f32.gmra.mxu0 %v240
        %v307 = vpop.f32.mrf.mxu0
        %v308 = vadd.f32 0.0, %v307
        %309 = vmatmul.f32.gmra.mxu0 %v243
        %v310 = vpop.f32.mrf.mxu0
        %v311 = vadd.f32 0.0, %v310
        %312 = vmatmul.f32.gmra.mxu0 %v246
        %v313 = vpop.f32.mrf.mxu0
        %v314 = vadd.f32 0.0, %v313
        %315 = vmatmul.f32.gmra.mxu0 %v249
        %v316 = vpop.f32.mrf.mxu0
        %v317 = vadd.f32 0.0, %v316
        %318 = vmatmul.f32.gmra.mxu0 %v252
        %v319 = vpop.f32.mrf.mxu0
        %v320 = vadd.f32 0.0, %v319
        %321 = vmatmul.f32.gmra.mxu0 %v255
        %v322 = vpop.f32.mrf.mxu0
        %v323 = vadd.f32 0.0, %v322
        %324 = vmatmul.f32.gmra.mxu0 %v258
        %v325 = vpop.f32.mrf.mxu0
        %v326 = vadd.f32 0.0, %v325
        %327 = vmatmul.f32.gmra.mxu0 %v261
        %v328 = vpop.f32.mrf.mxu0
        %v329 = vadd.f32 0.0, %v328
        %330 = vmatmul.f32.gmra.mxu0 %v264
        %v331 = vpop.f32.mrf.mxu0
        %v332 = vadd.f32 0.0, %v331
        %333 = vmatmul.f32.gmra.mxu0 %v267
        %v334 = vpop.f32.mrf.mxu0
        %v335 = vadd.f32 0.0, %v334
        %336 = vmatmul.f32.gmra.mxu0 %v270
        %v337 = vpop.f32.mrf.mxu0
        %v338 = vadd.f32 0.0, %v337
        %339 = vdwg.mxu0
        %s340 = sld [smem:[#allocation2]]
        %v341 = vstv %s340
        %v342 = vadd.f32 %v293, %v341
        %v343 = vadd.f32 %v296, %v341
        %v344 = vadd.f32 %v299, %v341
        %v345 = vadd.f32 %v302, %v341
        %v346 = vadd.f32 %v305, %v341
        %v347 = vadd.f32 %v308, %v341
        %v348 = vadd.f32 %v311, %v341
        %v349 = vadd.f32 %v314, %v341
        %v350 = vadd.f32 %v317, %v341
        %v351 = vadd.f32 %v320, %v341
        %v352 = vadd.f32 %v323, %v341
        %v353 = vadd.f32 %v326, %v341
        %v354 = vadd.f32 %v329, %v341
        %v355 = vadd.f32 %v332, %v341
        %v356 = vadd.f32 %v335, %v341
        %v357 = vadd.f32 %v338, %v341
        %s358 = sld [smem:[#allocation2 + $0x1]]
        %v359 = vstv %s358
        %v360 = vadd.f32 %v293, %v359
        %v361 = vadd.f32 %v296, %v359
        %v362 = vadd.f32 %v299, %v359
        %v363 = vadd.f32 %v302, %v359
        %v364 = vadd.f32 %v305, %v359
        %v365 = vadd.f32 %v308, %v359
        %v366 = vadd.f32 %v311, %v359
        %v367 = vadd.f32 %v314, %v359
        %v368 = vadd.f32 %v317, %v359
        %v369 = vadd.f32 %v320, %v359
        %v370 = vadd.f32 %v323, %v359
        %v371 = vadd.f32 %v326, %v359
        %v372 = vadd.f32 %v329, %v359
        %v373 = vadd.f32 %v332, %v359
        %v374 = vadd.f32 %v335, %v359
        %v375 = vadd.f32 %v338, %v359
        %vm376 = vcmp.ge.f32.partialorder %v342, 0.0
        %vm377 = vcmp.ge.f32.partialorder %v343, 0.0
        %vm378 = vcmp.ge.f32.partialorder %v344, 0.0
        %vm379 = vcmp.ge.f32.partialorder %v345, 0.0
        %vm380 = vcmp.ge.f32.partialorder %v346, 0.0
        %vm381 = vcmp.ge.f32.partialorder %v347, 0.0
        %vm382 = vcmp.ge.f32.partialorder %v348, 0.0
        %vm383 = vcmp.ge.f32.partialorder %v349, 0.0
        %vm384 = vcmp.ge.f32.partialorder %v350, 0.0
        %vm385 = vcmp.ge.f32.partialorder %v351, 0.0
        %vm386 = vcmp.ge.f32.partialorder %v352, 0.0
        %vm387 = vcmp.ge.f32.partialorder %v353, 0.0
        %vm388 = vcmp.ge.f32.partialorder %v354, 0.0
        %vm389 = vcmp.ge.f32.partialorder %v355, 0.0
        %vm390 = vcmp.ge.f32.partialorder %v356, 0.0
        %vm391 = vcmp.ge.f32.partialorder %v357, 0.0
        %v392 = vmul.f32 %v342, 0.01
        %v393 = vmul.f32 %v343, 0.01
        %v394 = vmul.f32 %v344, 0.01
        %v395 = vmul.f32 %v345, 0.01
        %v396 = vmul.f32 %v346, 0.01
        %v397 = vmul.f32 %v347, 0.01
        %v398 = vmul.f32 %v348, 0.01
        %v399 = vmul.f32 %v349, 0.01
        %v400 = vmul.f32 %v350, 0.01
        %v401 = vmul.f32 %v351, 0.01
        %v402 = vmul.f32 %v352, 0.01
        %v403 = vmul.f32 %v353, 0.01
        %v404 = vmul.f32 %v354, 0.01
        %v405 = vmul.f32 %v355, 0.01
        %v406 = vmul.f32 %v356, 0.01
        %v407 = vmul.f32 %v357, 0.01
        %v408 = vsel %vm376, %v342, %v392
        %v409 = vsel %vm377, %v343, %v393
        %v410 = vsel %vm378, %v344, %v394
        %v411 = vsel %vm379, %v345, %v395
        %v412 = vsel %vm380, %v346, %v396
        %v413 = vsel %vm381, %v347, %v397
        %v414 = vsel %vm382, %v348, %v398
        %v415 = vsel %vm383, %v349, %v399
        %v416 = vsel %vm384, %v350, %v400
        %v417 = vsel %vm385, %v351, %v401
        %v418 = vsel %vm386, %v352, %v402
        %v419 = vsel %vm387, %v353, %v403
        %v420 = vsel %vm388, %v354, %v404
        %v421 = vsel %vm389, %v355, %v405
        %v422 = vsel %vm390, %v356, %v406
        %v423 = vsel %vm391, %v357, %v407
        %vm424 = vcmp.ge.f32.partialorder %v360, 0.0
        %vm425 = vcmp.ge.f32.partialorder %v361, 0.0
        %vm426 = vcmp.ge.f32.partialorder %v362, 0.0
        %vm427 = vcmp.ge.f32.partialorder %v363, 0.0
        %vm428 = vcmp.ge.f32.partialorder %v364, 0.0
        %vm429 = vcmp.ge.f32.partialorder %v365, 0.0
        %vm430 = vcmp.ge.f32.partialorder %v366, 0.0
        %vm431 = vcmp.ge.f32.partialorder %v367, 0.0
        %vm432 = vcmp.ge.f32.partialorder %v368, 0.0
        %vm433 = vcmp.ge.f32.partialorder %v369, 0.0
        %vm434 = vcmp.ge.f32.partialorder %v370, 0.0
        %vm435 = vcmp.ge.f32.partialorder %v371, 0.0
        %vm436 = vcmp.ge.f32.partialorder %v372, 0.0
        %vm437 = vcmp.ge.f32.partialorder %v373, 0.0
        %vm438 = vcmp.ge.f32.partialorder %v374, 0.0
        %vm439 = vcmp.ge.f32.partialorder %v375, 0.0
        %v440 = vmul.f32 %v360, 0.01
        %v441 = vmul.f32 %v361, 0.01
        %v442 = vmul.f32 %v362, 0.01
        %v443 = vmul.f32 %v363, 0.01
        %v444 = vmul.f32 %v364, 0.01
        %v445 = vmul.f32 %v365, 0.01
        %v446 = vmul.f32 %v366, 0.01
        %v447 = vmul.f32 %v367, 0.01
        %v448 = vmul.f32 %v368, 0.01
        %v449 = vmul.f32 %v369, 0.01
        %v450 = vmul.f32 %v370, 0.01
        %v451 = vmul.f32 %v371, 0.01
        %v452 = vmul.f32 %v372, 0.01
        %v453 = vmul.f32 %v373, 0.01
        %v454 = vmul.f32 %v374, 0.01
        %v455 = vmul.f32 %v375, 0.01
        %v456 = vsel %vm424, %v360, %v440
        %v457 = vsel %vm425, %v361, %v441
        %v458 = vsel %vm426, %v362, %v442
        %v459 = vsel %vm427, %v363, %v443
        %v460 = vsel %vm428, %v364, %v444
        %v461 = vsel %vm429, %v365, %v445
        %v462 = vsel %vm430, %v366, %v446
        %v463 = vsel %vm431, %v367, %v447
        %v464 = vsel %vm432, %v368, %v448
        %v465 = vsel %vm433, %v369, %v449
        %v466 = vsel %vm434, %v370, %v450
        %v467 = vsel %vm435, %v371, %v451
        %v468 = vsel %vm436, %v372, %v452
        %v469 = vsel %vm437, %v373, %v453
        %v470 = vsel %vm438, %v374, %v454
        %v471 = vsel %vm439, %v375, %v455
        %488 = vrot.lane.b32.xlu0 %v456, 127
        %v489 = vpop.permute.xlu0 %488
        %490 = vrot.lane.b32.xlu0 %v457, 127
        %v491 = vpop.permute.xlu0 %490
        %492 = vrot.lane.b32.xlu0 %v458, 127
        %v493 = vpop.permute.xlu0 %492
        %494 = vrot.lane.b32.xlu0 %v459, 127
        %v495 = vpop.permute.xlu0 %494
        %496 = vrot.lane.b32.xlu0 %v460, 127
        %v497 = vpop.permute.xlu0 %496
        %498 = vrot.lane.b32.xlu0 %v461, 127
        %v499 = vpop.permute.xlu0 %498
        %500 = vrot.lane.b32.xlu0 %v462, 127
        %v501 = vpop.permute.xlu0 %500
        %502 = vrot.lane.b32.xlu0 %v463, 127
        %v503 = vpop.permute.xlu0 %502
        %504 = vrot.lane.b32.xlu0 %v464, 127
        %v505 = vpop.permute.xlu0 %504
        %506 = vrot.lane.b32.xlu0 %v465, 127
        %v507 = vpop.permute.xlu0 %506
        %508 = vrot.lane.b32.xlu0 %v466, 127
        %v509 = vpop.permute.xlu0 %508
        %510 = vrot.lane.b32.xlu0 %v467, 127
        %v511 = vpop.permute.xlu0 %510
        %512 = vrot.lane.b32.xlu0 %v468, 127
        %v513 = vpop.permute.xlu0 %512
        %514 = vrot.lane.b32.xlu0 %v469, 127
        %v515 = vpop.permute.xlu0 %514
        %516 = vrot.lane.b32.xlu0 %v470, 127
        %v517 = vpop.permute.xlu0 %516
        %518 = vrot.lane.b32.xlu0 %v471, 127
        %v519 = vpop.permute.xlu0 %518
        %v536 = vsub.f32 %v408, %v489
        %v537 = vsub.f32 %v409, %v491
        %v538 = vsub.f32 %v410, %v493
        %v539 = vsub.f32 %v411, %v495
        %v540 = vsub.f32 %v412, %v497
        %v541 = vsub.f32 %v413, %v499
        %v542 = vsub.f32 %v414, %v501
        %v543 = vsub.f32 %v415, %v503
        %v544 = vsub.f32 %v416, %v505
        %v545 = vsub.f32 %v417, %v507
        %v546 = vsub.f32 %v418, %v509
        %v547 = vsub.f32 %v419, %v511
        %v548 = vsub.f32 %v420, %v513
        %v549 = vsub.f32 %v421, %v515
        %v550 = vsub.f32 %v422, %v517
        %v551 = vsub.f32 %v423, %v519
        %v552 = vmul.f32 %v536, 1.442695
        %v553 = vpow.pop %v552
        %v554 = vmul.f32 %v537, 1.442695
        %v555 = vpow.pop %v554
        %v556 = vmul.f32 %v538, 1.442695
        %v557 = vpow.pop %v556
        %v558 = vmul.f32 %v539, 1.442695
        %v559 = vpow.pop %v558
        %v560 = vmul.f32 %v540, 1.442695
        %v561 = vpow.pop %v560
        %v562 = vmul.f32 %v541, 1.442695
        %v563 = vpow.pop %v562
        %v564 = vmul.f32 %v542, 1.442695
        %v565 = vpow.pop %v564
        %v566 = vmul.f32 %v543, 1.442695
        %v567 = vpow.pop %v566
        %v568 = vmul.f32 %v544, 1.442695
        %v569 = vpow.pop %v568
        %v570 = vmul.f32 %v545, 1.442695
        %v571 = vpow.pop %v570
        %v572 = vmul.f32 %v546, 1.442695
        %v573 = vpow.pop %v572
        %v574 = vmul.f32 %v547, 1.442695
        %v575 = vpow.pop %v574
        %v576 = vmul.f32 %v548, 1.442695
        %v577 = vpow.pop %v576
        %v578 = vmul.f32 %v549, 1.442695
        %v579 = vpow.pop %v578
        %v580 = vmul.f32 %v550, 1.442695
        %v581 = vpow.pop %v580
        %v582 = vmul.f32 %v551, 1.442695
        %v583 = vpow.pop %v582
        %v584 = vadd.f32 %v553, 1.0
        %v585 = vadd.f32 %v555, 1.0
        %v586 = vadd.f32 %v557, 1.0
        %v587 = vadd.f32 %v559, 1.0
        %v588 = vadd.f32 %v561, 1.0
        %v589 = vadd.f32 %v563, 1.0
        %v590 = vadd.f32 %v565, 1.0
        %v591 = vadd.f32 %v567, 1.0
        %v592 = vadd.f32 %v569, 1.0
        %v593 = vadd.f32 %v571, 1.0
        %v594 = vadd.f32 %v573, 1.0
        %v595 = vadd.f32 %v575, 1.0
        %v596 = vadd.f32 %v577, 1.0
        %v597 = vadd.f32 %v579, 1.0
        %v598 = vadd.f32 %v581, 1.0
        %v599 = vadd.f32 %v583, 1.0
        %v600 = vrcp.pop %v584
        %v601 = vmul.f32 %v584, %v600
        %v602 = vsub.f32 1.0, %v601
        %v603 = vmul.f32 %v600, %v602
        %v604 = vadd.f32 %v600, %v603
        %vm605 = vweird.f32 %v584
        %vm606 = vweird.f32 %v600
        %vm607 = vmor %vm605, %vm606
        %v608 = vsel %vm607, %v600, %v604
        %v609 = vand.u32 2147483647, %v584
        %vm610 = vcmp.eq.f32.partialorder %v609, 8.507059e+37
        %v611 = vand.u32 %v584, 2147483648
        %v612 = vor.u32 1.1754944e-38, %v611
        %v613 = vsel %vm610, %v612, %v608
        %v614 = vmul.f32 1.0, %v613
        %v615 = vrcp.pop %v585
        %v616 = vmul.f32 %v585, %v615
        %v617 = vsub.f32 1.0, %v616
        %v618 = vmul.f32 %v615, %v617
        %v619 = vadd.f32 %v615, %v618
        %vm620 = vweird.f32 %v585
        %vm621 = vweird.f32 %v615
        %vm622 = vmor %vm620, %vm621
        %v623 = vsel %vm622, %v615, %v619
        %v624 = vand.u32 2147483647, %v585
        %vm625 = vcmp.eq.f32.partialorder %v624, 8.507059e+37
        %v626 = vand.u32 %v585, 2147483648
        %v627 = vor.u32 1.1754944e-38, %v626
        %v628 = vsel %vm625, %v627, %v623
        %v629 = vmul.f32 1.0, %v628
        %v630 = vrcp.pop %v586
        %v631 = vmul.f32 %v586, %v630
        %v632 = vsub.f32 1.0, %v631
        %v633 = vmul.f32 %v630, %v632
        %v634 = vadd.f32 %v630, %v633
        %vm635 = vweird.f32 %v586
        %vm636 = vweird.f32 %v630
        %vm637 = vmor %vm635, %vm636
        %v638 = vsel %vm637, %v630, %v634
        %v639 = vand.u32 2147483647, %v586
        %vm640 = vcmp.eq.f32.partialorder %v639, 8.507059e+37
        %v641 = vand.u32 %v586, 2147483648
        %v642 = vor.u32 1.1754944e-38, %v641
        %v643 = vsel %vm640, %v642, %v638
        %v644 = vmul.f32 1.0, %v643
        %v645 = vrcp.pop %v587
        %v646 = vmul.f32 %v587, %v645
        %v647 = vsub.f32 1.0, %v646
        %v648 = vmul.f32 %v645, %v647
        %v649 = vadd.f32 %v645, %v648
        %vm650 = vweird.f32 %v587
        %vm651 = vweird.f32 %v645
        %vm652 = vmor %vm650, %vm651
        %v653 = vsel %vm652, %v645, %v649
        %v654 = vand.u32 2147483647, %v587
        %vm655 = vcmp.eq.f32.partialorder %v654, 8.507059e+37
        %v656 = vand.u32 %v587, 2147483648
        %v657 = vor.u32 1.1754944e-38, %v656
        %v658 = vsel %vm655, %v657, %v653
        %v659 = vmul.f32 1.0, %v658
        %v660 = vrcp.pop %v588
        %v661 = vmul.f32 %v588, %v660
        %v662 = vsub.f32 1.0, %v661
        %v663 = vmul.f32 %v660, %v662
        %v664 = vadd.f32 %v660, %v663
        %vm665 = vweird.f32 %v588
        %vm666 = vweird.f32 %v660
        %vm667 = vmor %vm665, %vm666
        %v668 = vsel %vm667, %v660, %v664
        %v669 = vand.u32 2147483647, %v588
        %vm670 = vcmp.eq.f32.partialorder %v669, 8.507059e+37
        %v671 = vand.u32 %v588, 2147483648
        %v672 = vor.u32 1.1754944e-38, %v671
        %v673 = vsel %vm670, %v672, %v668
        %v674 = vmul.f32 1.0, %v673
        %v675 = vrcp.pop %v589
        %v676 = vmul.f32 %v589, %v675
        %v677 = vsub.f32 1.0, %v676
        %v678 = vmul.f32 %v675, %v677
        %v679 = vadd.f32 %v675, %v678
        %vm680 = vweird.f32 %v589
        %vm681 = vweird.f32 %v675
        %vm682 = vmor %vm680, %vm681
        %v683 = vsel %vm682, %v675, %v679
        %v684 = vand.u32 2147483647, %v589
        %vm685 = vcmp.eq.f32.partialorder %v684, 8.507059e+37
        %v686 = vand.u32 %v589, 2147483648
        %v687 = vor.u32 1.1754944e-38, %v686
        %v688 = vsel %vm685, %v687, %v683
        %v689 = vmul.f32 1.0, %v688
        %v690 = vrcp.pop %v590
        %v691 = vmul.f32 %v590, %v690
        %v692 = vsub.f32 1.0, %v691
        %v693 = vmul.f32 %v690, %v692
        %v694 = vadd.f32 %v690, %v693
        %vm695 = vweird.f32 %v590
        %vm696 = vweird.f32 %v690
        %vm697 = vmor %vm695, %vm696
        %v698 = vsel %vm697, %v690, %v694
        %v699 = vand.u32 2147483647, %v590
        %vm700 = vcmp.eq.f32.partialorder %v699, 8.507059e+37
        %v701 = vand.u32 %v590, 2147483648
        %v702 = vor.u32 1.1754944e-38, %v701
        %v703 = vsel %vm700, %v702, %v698
        %v704 = vmul.f32 1.0, %v703
        %v705 = vrcp.pop %v591
        %v706 = vmul.f32 %v591, %v705
        %v707 = vsub.f32 1.0, %v706
        %v708 = vmul.f32 %v705, %v707
        %v709 = vadd.f32 %v705, %v708
        %vm710 = vweird.f32 %v591
        %vm711 = vweird.f32 %v705
        %vm712 = vmor %vm710, %vm711
        %v713 = vsel %vm712, %v705, %v709
        %v714 = vand.u32 2147483647, %v591
        %vm715 = vcmp.eq.f32.partialorder %v714, 8.507059e+37
        %v716 = vand.u32 %v591, 2147483648
        %v717 = vor.u32 1.1754944e-38, %v716
        %v718 = vsel %vm715, %v717, %v713
        %v719 = vmul.f32 1.0, %v718
        %v720 = vrcp.pop %v592
        %v721 = vmul.f32 %v592, %v720
        %v722 = vsub.f32 1.0, %v721
        %v723 = vmul.f32 %v720, %v722
        %v724 = vadd.f32 %v720, %v723
        %vm725 = vweird.f32 %v592
        %vm726 = vweird.f32 %v720
        %vm727 = vmor %vm725, %vm726
        %v728 = vsel %vm727, %v720, %v724
        %v729 = vand.u32 2147483647, %v592
        %vm730 = vcmp.eq.f32.partialorder %v729, 8.507059e+37
        %v731 = vand.u32 %v592, 2147483648
        %v732 = vor.u32 1.1754944e-38, %v731
        %v733 = vsel %vm730, %v732, %v728
        %v734 = vmul.f32 1.0, %v733
        %v735 = vrcp.pop %v593
        %v736 = vmul.f32 %v593, %v735
        %v737 = vsub.f32 1.0, %v736
        %v738 = vmul.f32 %v735, %v737
        %v739 = vadd.f32 %v735, %v738
        %vm740 = vweird.f32 %v593
        %vm741 = vweird.f32 %v735
        %vm742 = vmor %vm740, %vm741
        %v743 = vsel %vm742, %v735, %v739
        %v744 = vand.u32 2147483647, %v593
        %vm745 = vcmp.eq.f32.partialorder %v744, 8.507059e+37
        %v746 = vand.u32 %v593, 2147483648
        %v747 = vor.u32 1.1754944e-38, %v746
        %v748 = vsel %vm745, %v747, %v743
        %v749 = vmul.f32 1.0, %v748
        %v750 = vrcp.pop %v594
        %v751 = vmul.f32 %v594, %v750
        %v752 = vsub.f32 1.0, %v751
        %v753 = vmul.f32 %v750, %v752
        %v754 = vadd.f32 %v750, %v753
        %vm755 = vweird.f32 %v594
        %vm756 = vweird.f32 %v750
        %vm757 = vmor %vm755, %vm756
        %v758 = vsel %vm757, %v750, %v754
        %v759 = vand.u32 2147483647, %v594
        %vm760 = vcmp.eq.f32.partialorder %v759, 8.507059e+37
        %v761 = vand.u32 %v594, 2147483648
        %v762 = vor.u32 1.1754944e-38, %v761
        %v763 = vsel %vm760, %v762, %v758
        %v764 = vmul.f32 1.0, %v763
        %v765 = vrcp.pop %v595
        %v766 = vmul.f32 %v595, %v765
        %v767 = vsub.f32 1.0, %v766
        %v768 = vmul.f32 %v765, %v767
        %v769 = vadd.f32 %v765, %v768
        %vm770 = vweird.f32 %v595
        %vm771 = vweird.f32 %v765
        %vm772 = vmor %vm770, %vm771
        %v773 = vsel %vm772, %v765, %v769
        %v774 = vand.u32 2147483647, %v595
        %vm775 = vcmp.eq.f32.partialorder %v774, 8.507059e+37
        %v776 = vand.u32 %v595, 2147483648
        %v777 = vor.u32 1.1754944e-38, %v776
        %v778 = vsel %vm775, %v777, %v773
        %v779 = vmul.f32 1.0, %v778
        %v780 = vrcp.pop %v596
        %v781 = vmul.f32 %v596, %v780
        %v782 = vsub.f32 1.0, %v781
        %v783 = vmul.f32 %v780, %v782
        %v784 = vadd.f32 %v780, %v783
        %vm785 = vweird.f32 %v596
        %vm786 = vweird.f32 %v780
        %vm787 = vmor %vm785, %vm786
        %v788 = vsel %vm787, %v780, %v784
        %v789 = vand.u32 2147483647, %v596
        %vm790 = vcmp.eq.f32.partialorder %v789, 8.507059e+37
        %v791 = vand.u32 %v596, 2147483648
        %v792 = vor.u32 1.1754944e-38, %v791
        %v793 = vsel %vm790, %v792, %v788
        %v794 = vmul.f32 1.0, %v793
        %v795 = vrcp.pop %v597
        %v796 = vmul.f32 %v597, %v795
        %v797 = vsub.f32 1.0, %v796
        %v798 = vmul.f32 %v795, %v797
        %v799 = vadd.f32 %v795, %v798
        %vm800 = vweird.f32 %v597
        %vm801 = vweird.f32 %v795
        %vm802 = vmor %vm800, %vm801
        %v803 = vsel %vm802, %v795, %v799
        %v804 = vand.u32 2147483647, %v597
        %vm805 = vcmp.eq.f32.partialorder %v804, 8.507059e+37
        %v806 = vand.u32 %v597, 2147483648
        %v807 = vor.u32 1.1754944e-38, %v806
        %v808 = vsel %vm805, %v807, %v803
        %v809 = vmul.f32 1.0, %v808
        %v810 = vrcp.pop %v598
        %v811 = vmul.f32 %v598, %v810
        %v812 = vsub.f32 1.0, %v811
        %v813 = vmul.f32 %v810, %v812
        %v814 = vadd.f32 %v810, %v813
        %vm815 = vweird.f32 %v598
        %vm816 = vweird.f32 %v810
        %vm817 = vmor %vm815, %vm816
        %v818 = vsel %vm817, %v810, %v814
        %v819 = vand.u32 2147483647, %v598
        %vm820 = vcmp.eq.f32.partialorder %v819, 8.507059e+37
        %v821 = vand.u32 %v598, 2147483648
        %v822 = vor.u32 1.1754944e-38, %v821
        %v823 = vsel %vm820, %v822, %v818
        %v824 = vmul.f32 1.0, %v823
        %v825 = vrcp.pop %v599
        %v826 = vmul.f32 %v599, %v825
        %v827 = vsub.f32 1.0, %v826
        %v828 = vmul.f32 %v825, %v827
        %v829 = vadd.f32 %v825, %v828
        %vm830 = vweird.f32 %v599
        %vm831 = vweird.f32 %v825
        %vm832 = vmor %vm830, %vm831
        %v833 = vsel %vm832, %v825, %v829
        %v834 = vand.u32 2147483647, %v599
        %vm835 = vcmp.eq.f32.partialorder %v834, 8.507059e+37
        %v836 = vand.u32 %v599, 2147483648
        %v837 = vor.u32 1.1754944e-38, %v836
        %v838 = vsel %vm835, %v837, %v833
        %v839 = vmul.f32 1.0, %v838
        %v840 = vsub.f32 1.0, %v614
        %v841 = vsub.f32 1.0, %v629
        %v842 = vsub.f32 1.0, %v644
        %v843 = vsub.f32 1.0, %v659
        %v844 = vsub.f32 1.0, %v674
        %v845 = vsub.f32 1.0, %v689
        %v846 = vsub.f32 1.0, %v704
        %v847 = vsub.f32 1.0, %v719
        %v848 = vsub.f32 1.0, %v734
        %v849 = vsub.f32 1.0, %v749
        %v850 = vsub.f32 1.0, %v764
        %v851 = vsub.f32 1.0, %v779
        %v852 = vsub.f32 1.0, %v794
        %v853 = vsub.f32 1.0, %v809
        %v854 = vsub.f32 1.0, %v824
        %v855 = vsub.f32 1.0, %v839
        %872 = vrot.lane.b32.xlu0 %v614, 1
        %v873 = vpop.permute.xlu0 %872
        %874 = vrot.lane.b32.xlu0 %v629, 1
        %v875 = vpop.permute.xlu0 %874
        %876 = vrot.lane.b32.xlu0 %v644, 1
        %v877 = vpop.permute.xlu0 %876
        %878 = vrot.lane.b32.xlu0 %v659, 1
        %v879 = vpop.permute.xlu0 %878
        %880 = vrot.lane.b32.xlu0 %v674, 1
        %v881 = vpop.permute.xlu0 %880
        %882 = vrot.lane.b32.xlu0 %v689, 1
        %v883 = vpop.permute.xlu0 %882
        %884 = vrot.lane.b32.xlu0 %v704, 1
        %v885 = vpop.permute.xlu0 %884
        %886 = vrot.lane.b32.xlu0 %v719, 1
        %v887 = vpop.permute.xlu0 %886
        %888 = vrot.lane.b32.xlu0 %v734, 1
        %v889 = vpop.permute.xlu0 %888
        %890 = vrot.lane.b32.xlu0 %v749, 1
        %v891 = vpop.permute.xlu0 %890
        %892 = vrot.lane.b32.xlu0 %v764, 1
        %v893 = vpop.permute.xlu0 %892
        %894 = vrot.lane.b32.xlu0 %v779, 1
        %v895 = vpop.permute.xlu0 %894
        %896 = vrot.lane.b32.xlu0 %v794, 1
        %v897 = vpop.permute.xlu0 %896
        %898 = vrot.lane.b32.xlu0 %v809, 1
        %v899 = vpop.permute.xlu0 %898
        %900 = vrot.lane.b32.xlu0 %v824, 1
        %v901 = vpop.permute.xlu0 %900
        %902 = vrot.lane.b32.xlu0 %v839, 1
        %v903 = vpop.permute.xlu0 %902
        %vm920 = vcmask 7168
        %v921 = vsel %vm920, %v840, %v873
        %v922 = vsel %vm920, %v841, %v875
        %v923 = vsel %vm920, %v842, %v877
        %v924 = vsel %vm920, %v843, %v879
        %v925 = vsel %vm920, %v844, %v881
        %v926 = vsel %vm920, %v845, %v883
        %v927 = vsel %vm920, %v846, %v885
        %v928 = vsel %vm920, %v847, %v887
        %v929 = vsel %vm920, %v848, %v889
        %v930 = vsel %vm920, %v849, %v891
        %v931 = vsel %vm920, %v850, %v893
        %v932 = vsel %vm920, %v851, %v895
        %v933 = vsel %vm920, %v852, %v897
        %v934 = vsel %vm920, %v853, %v899
        %v935 = vsel %vm920, %v854, %v901
        %v936 = vsel %vm920, %v855, %v903
        %vm937 = vcmask 15360
        %938 = vst.msk [vmem:[%s186] sm:$0xff] %vm937, %v921
        %939 = vst.msk [vmem:[%s186 + $0x8] sm:$0xff] %vm937, %v922
        %940 = vst.msk [vmem:[%s186 + $0x10] sm:$0xff] %vm937, %v923
        %941 = vst.msk [vmem:[%s186 + $0x18] sm:$0xff] %vm937, %v924
        %942 = vst.msk [vmem:[%s186 + $0x20] sm:$0xff] %vm937, %v925
        %943 = vst.msk [vmem:[%s186 + $0x28] sm:$0xff] %vm937, %v926
        %944 = vst.msk [vmem:[%s186 + $0x30] sm:$0xff] %vm937, %v927
        %945 = vst.msk [vmem:[%s186 + $0x38] sm:$0xff] %vm937, %v928
        %946 = vst.msk [vmem:[%s186 + $0x40] sm:$0xff] %vm937, %v929
        %947 = vst.msk [vmem:[%s186 + $0x48] sm:$0xff] %vm937, %v930
        %948 = vst.msk [vmem:[%s186 + $0x50] sm:$0xff] %vm937, %v931
        %949 = vst.msk [vmem:[%s186 + $0x58] sm:$0xff] %vm937, %v932
        %950 = vst.msk [vmem:[%s186 + $0x60] sm:$0xff] %vm937, %v933
        %951 = vst.msk [vmem:[%s186 + $0x68] sm:$0xff] %vm937, %v934
        %952 = vst.msk [vmem:[%s186 + $0x70] sm:$0xff] %vm937, %v935
        %953 = vst.msk [vmem:[%s186 + $0x78] sm:$0xff] %vm937, %v936
        %s954 = sand.u32 %s91, 1
        %s955 = sand.u32 %s91, 1
        %s956 = smul.addr %s955, 128
        %s957 = scalar_lea.vmem [#allocation4], %s956
        // Predicated region
        $region37: #{tpu_custom_call.1} parent=31 // pred_check
          %p958 = pneg %p101
        $region38: #{tpu_custom_call.1} parent=31 // pred_check_branch
          %960 = sbr.rel (%p958) target = $region40
        $region39: #{tpu_custom_call.1} parent=31 // pred_region
          %s961 = smul.u32 16, %s15
          %s962 = ssub.s32 38, %s961
          %p963 = scmp.lt.s32.totalorder %s962, 16
          %s964 = scalar_select %p963, %s962, 16
          %s965 = smul.u32 8, %s964
          %p966 = scmp.ne.s32.totalorder 0, %s965
          %s967 = smul.addr %s961, 8
          %s968 = scalar_lea.vmem %s3, %s967
          // Predicated region
          $region41: #{tpu_custom_call.1} parent=39 // pred_check
            %p969 = pneg %p966
          $region42: #{tpu_custom_call.1} parent=39 // pred_check_branch
            %971 = sbr.rel (%p969) target = $region44
          $region43: #{tpu_custom_call.1} parent=39 // pred_region
            // Predicated region
            $region45: #{tpu_custom_call.1} parent=43 // pred_check
              _
            $region46: #{tpu_custom_call.1} parent=43 // pred_check_branch
              %973 = sbr.rel (0) target = $region48
            $region47: #{tpu_custom_call.1} parent=43 // pred_region
              // Predicated region
              $region67: #{tpu_custom_call.1} parent=47 // pred_check
                _
              $region68: #{tpu_custom_call.1} parent=47 // pred_check_branch
                %1053 = sbr.rel (0) target = $region70
              $region69: #{tpu_custom_call.1} parent=47 // pred_region
                %s1054 = sshrl.u32 %s964, 4
                // While loop
                $region71: #{tpu_custom_call.1} parent=69 // loop_pre_header
                  _
                $region72: #{tpu_custom_call.1} parent=69 // loop_header
                  %s1056 = sphi 0, %s1058
                  %p1057 = scmp.ge.s32.totalorder %s1056, %s1054
                  %s1061 = sphi 0, %s1098
                  %s1062 = sphi %s957, %s1101
                  %s1063 = sphi %s968, %s1102
                $region73: #{tpu_custom_call.1} parent=69 // loop_header_branch
                  %1060 = sbr.rel (%p1057) target = $region77
                $region74: #{tpu_custom_call.1} parent=69 // loop_body
                  %v1064 = vld [vmem:[%s1062] sm:$0xff]
                  %1065 = vst [vmem:[%s1063] sm:$0xff] %v1064
                  %v1066 = vld [vmem:[%s1062 + $0x8] sm:$0xff]
                  %1067 = vst [vmem:[%s1063 + $0x8] sm:$0xff] %v1066
                  %v1068 = vld [vmem:[%s1062 + $0x10] sm:$0xff]
                  %1069 = vst [vmem:[%s1063 + $0x10] sm:$0xff] %v1068
                  %v1070 = vld [vmem:[%s1062 + $0x18] sm:$0xff]
                  %1071 = vst [vmem:[%s1063 + $0x18] sm:$0xff] %v1070
                  %v1072 = vld [vmem:[%s1062 + $0x20] sm:$0xff]
                  %1073 = vst [vmem:[%s1063 + $0x20] sm:$0xff] %v1072
                  %v1074 = vld [vmem:[%s1062 + $0x28] sm:$0xff]
                  %1075 = vst [vmem:[%s1063 + $0x28] sm:$0xff] %v1074
                  %v1076 = vld [vmem:[%s1062 + $0x30] sm:$0xff]
                  %1077 = vst [vmem:[%s1063 + $0x30] sm:$0xff] %v1076
                  %v1078 = vld [vmem:[%s1062 + $0x38] sm:$0xff]
                  %1079 = vst [vmem:[%s1063 + $0x38] sm:$0xff] %v1078
                  %v1080 = vld [vmem:[%s1062 + $0x40] sm:$0xff]
                  %1081 = vst [vmem:[%s1063 + $0x40] sm:$0xff] %v1080
                  %v1082 = vld [vmem:[%s1062 + $0x48] sm:$0xff]
                  %1083 = vst [vmem:[%s1063 + $0x48] sm:$0xff] %v1082
                  %v1084 = vld [vmem:[%s1062 + $0x50] sm:$0xff]
                  %1085 = vst [vmem:[%s1063 + $0x50] sm:$0xff] %v1084
                  %v1086 = vld [vmem:[%s1062 + $0x58] sm:$0xff]
                  %1087 = vst [vmem:[%s1063 + $0x58] sm:$0xff] %v1086
                  %v1088 = vld [vmem:[%s1062 + $0x60] sm:$0xff]
                  %1089 = vst [vmem:[%s1063 + $0x60] sm:$0xff] %v1088
                  %v1090 = vld [vmem:[%s1062 + $0x68] sm:$0xff]
                  %1091 = vst [vmem:[%s1063 + $0x68] sm:$0xff] %v1090
                  %v1092 = vld [vmem:[%s1062 + $0x70] sm:$0xff]
                  %1093 = vst [vmem:[%s1063 + $0x70] sm:$0xff] %v1092
                  %v1094 = vld [vmem:[%s1062 + $0x78] sm:$0xff]
                  %1095 = vst [vmem:[%s1063 + $0x78] sm:$0xff] %v1094
                  %s1096 = sadd.s32 1, %s1061
                  %p1097 = scmp.ge.s32.totalorder %s1096, %s1054
                  %s1098 = scalar_select %p1097, 0, %s1096
                  %s1099 = smul.u32 %s1098, 128
                  %s1100 = smul.u32 %s1098, 128
                  %s1101 = scalar_lea.vmem %s957, %s1099 [#allocation4]
                  %s1102 = scalar_lea.vmem %s968, %s1100
                $region75: #{tpu_custom_call.1} parent=69 // loop_footer
                  %s1058 = sadd.s32 %s1056, 1
                $region76: #{tpu_custom_call.1} parent=69 // loop_footer_branch
                  %1055 = sbr.rel target = $region72
                $region77: #{tpu_custom_call.1} parent=69 // loop_exit
                  _
                %s1103 = sshrl.u32 %s964, 4
                %s1104 = sand.u32 %s964, 15
                %s1105 = smul.u32 %s1103, 16
                %s1106 = smul.u32 8, %s1105
                %s1107 = scalar_lea.vmem %s957, %s1106 [#allocation4]
                %s1108 = smul.u32 8, %s1105
                %s1109 = scalar_lea.vmem %s968, %s1108
                // While loop
                $region78: #{tpu_custom_call.1} parent=69 // loop_pre_header
                  _
                $region79: #{tpu_custom_call.1} parent=69 // loop_header
                  %s1111 = sphi 0, %s1113
                  %p1112 = scmp.ge.s32.totalorder %s1111, %s1104
                  %s1116 = sphi 0, %s1123
                  %s1117 = sphi %s1107, %s1126
                  %s1118 = sphi %s1109, %s1127
                $region80: #{tpu_custom_call.1} parent=69 // loop_header_branch
                  %1115 = sbr.rel (%p1112) target = $region84
                $region81: #{tpu_custom_call.1} parent=69 // loop_body
                  %v1119 = vld [vmem:[%s1117] sm:$0xff]
                  %1120 = vst [vmem:[%s1118] sm:$0xff] %v1119
                  %s1121 = sadd.s32 1, %s1116
                  %p1122 = scmp.ge.s32.totalorder %s1121, %s1104
                  %s1123 = scalar_select %p1122, 0, %s1121
                  %s1124 = smul.u32 %s1123, 8
                  %s1125 = smul.u32 %s1123, 8
                  %s1126 = scalar_lea.vmem %s1107, %s1124 [#allocation4]
                  %s1127 = scalar_lea.vmem %s1109, %s1125
                $region82: #{tpu_custom_call.1} parent=69 // loop_footer
                  %s1113 = sadd.s32 %s1111, 1
                $region83: #{tpu_custom_call.1} parent=69 // loop_footer_branch
                  %1110 = sbr.rel target = $region79
                $region84: #{tpu_custom_call.1} parent=69 // loop_exit
                  _
              $region70: #{tpu_custom_call.1} parent=47 // pred_fallthru
                _
              // Predicated region
              $region85: #{tpu_custom_call.1} parent=47 // pred_check
                _
              $region86: #{tpu_custom_call.1} parent=47 // pred_check_branch
                %1129 = sbr.rel target = $region88
              $region87: #{tpu_custom_call.1} parent=47 // pred_region
                _
              $region88: #{tpu_custom_call.1} parent=47 // pred_fallthru
                _
            $region48: #{tpu_custom_call.1} parent=43 // pred_fallthru
              _
            // Predicated region
            $region49: #{tpu_custom_call.1} parent=43 // pred_check
              _
            $region50: #{tpu_custom_call.1} parent=43 // pred_check_branch
              %975 = sbr.rel target = $region52
            $region51: #{tpu_custom_call.1} parent=43 // pred_region
              %s977 = ssub.s32 256, 1
              %s978 = sshrl.u32 %s964, 4
              // While loop
              $region53: #{tpu_custom_call.1} parent=51 // loop_pre_header
                _
              $region54: #{tpu_custom_call.1} parent=51 // loop_header
                %s980 = sphi 0, %s982
                %p981 = scmp.ge.s32.totalorder %s980, %s978
                %s985 = sphi 0, %s1022
                %s986 = sphi %s957, %s1025
                %s987 = sphi %s968, %s1026
              $region55: #{tpu_custom_call.1} parent=51 // loop_header_branch
                %984 = sbr.rel (%p981) target = $region59
              $region56: #{tpu_custom_call.1} parent=51 // loop_body
                %v988 = vld [vmem:[%s986] sm:%s977]
                %989 = vst [vmem:[%s987] sm:%s977] %v988
                %v990 = vld [vmem:[%s986 + $0x8] sm:%s977]
                %991 = vst [vmem:[%s987 + $0x8] sm:%s977] %v990
                %v992 = vld [vmem:[%s986 + $0x10] sm:%s977]
                %993 = vst [vmem:[%s987 + $0x10] sm:%s977] %v992
                %v994 = vld [vmem:[%s986 + $0x18] sm:%s977]
                %995 = vst [vmem:[%s987 + $0x18] sm:%s977] %v994
                %v996 = vld [vmem:[%s986 + $0x20] sm:%s977]
                %997 = vst [vmem:[%s987 + $0x20] sm:%s977] %v996
                %v998 = vld [vmem:[%s986 + $0x28] sm:%s977]
                %999 = vst [vmem:[%s987 + $0x28] sm:%s977] %v998
                %v1000 = vld [vmem:[%s986 + $0x30] sm:%s977]
                %1001 = vst [vmem:[%s987 + $0x30] sm:%s977] %v1000
                %v1002 = vld [vmem:[%s986 + $0x38] sm:%s977]
                %1003 = vst [vmem:[%s987 + $0x38] sm:%s977] %v1002
                %v1004 = vld [vmem:[%s986 + $0x40] sm:%s977]
                %1005 = vst [vmem:[%s987 + $0x40] sm:%s977] %v1004
                %v1006 = vld [vmem:[%s986 + $0x48] sm:%s977]
                %1007 = vst [vmem:[%s987 + $0x48] sm:%s977] %v1006
                %v1008 = vld [vmem:[%s986 + $0x50] sm:%s977]
                %1009 = vst [vmem:[%s987 + $0x50] sm:%s977] %v1008
                %v1010 = vld [vmem:[%s986 + $0x58] sm:%s977]
                %1011 = vst [vmem:[%s987 + $0x58] sm:%s977] %v1010
                %v1012 = vld [vmem:[%s986 + $0x60] sm:%s977]
                %1013 = vst [vmem:[%s987 + $0x60] sm:%s977] %v1012
                %v1014 = vld [vmem:[%s986 + $0x68] sm:%s977]
                %1015 = vst [vmem:[%s987 + $0x68] sm:%s977] %v1014
                %v1016 = vld [vmem:[%s986 + $0x70] sm:%s977]
                %1017 = vst [vmem:[%s987 + $0x70] sm:%s977] %v1016
                %v1018 = vld [vmem:[%s986 + $0x78] sm:%s977]
                %1019 = vst [vmem:[%s987 + $0x78] sm:%s977] %v1018
                %s1020 = sadd.s32 1, %s985
                %p1021 = scmp.ge.s32.totalorder %s1020, %s978
                %s1022 = scalar_select %p1021, 0, %s1020
                %s1023 = smul.u32 %s1022, 128
                %s1024 = smul.u32 %s1022, 128
                %s1025 = scalar_lea.vmem %s957, %s1023 [#allocation4]
                %s1026 = scalar_lea.vmem %s968, %s1024
              $region57: #{tpu_custom_call.1} parent=51 // loop_footer
                %s982 = sadd.s32 %s980, 1
              $region58: #{tpu_custom_call.1} parent=51 // loop_footer_branch
                %979 = sbr.rel target = $region54
              $region59: #{tpu_custom_call.1} parent=51 // loop_exit
                _
              %s1027 = sshrl.u32 %s964, 4
              %s1028 = sand.u32 %s964, 15
              %s1029 = smul.u32 %s1027, 16
              %s1030 = smul.u32 8, %s1029
              %s1031 = scalar_lea.vmem %s957, %s1030 [#allocation4]
              %s1032 = smul.u32 8, %s1029
              %s1033 = scalar_lea.vmem %s968, %s1032
              // While loop
              $region60: #{tpu_custom_call.1} parent=51 // loop_pre_header
                _
              $region61: #{tpu_custom_call.1} parent=51 // loop_header
                %s1035 = sphi 0, %s1037
                %p1036 = scmp.ge.s32.totalorder %s1035, %s1028
                %s1040 = sphi 0, %s1047
                %s1041 = sphi %s1031, %s1050
                %s1042 = sphi %s1033, %s1051
              $region62: #{tpu_custom_call.1} parent=51 // loop_header_branch
                %1039 = sbr.rel (%p1036) target = $region66
              $region63: #{tpu_custom_call.1} parent=51 // loop_body
                %v1043 = vld [vmem:[%s1041] sm:%s977]
                %1044 = vst [vmem:[%s1042] sm:%s977] %v1043
                %s1045 = sadd.s32 1, %s1040
                %p1046 = scmp.ge.s32.totalorder %s1045, %s1028
                %s1047 = scalar_select %p1046, 0, %s1045
                %s1048 = smul.u32 %s1047, 8
                %s1049 = smul.u32 %s1047, 8
                %s1050 = scalar_lea.vmem %s1031, %s1048 [#allocation4]
                %s1051 = scalar_lea.vmem %s1033, %s1049
              $region64: #{tpu_custom_call.1} parent=51 // loop_footer
                %s1037 = sadd.s32 %s1035, 1
              $region65: #{tpu_custom_call.1} parent=51 // loop_footer_branch
                %1034 = sbr.rel target = $region61
              $region66: #{tpu_custom_call.1} parent=51 // loop_exit
                _
            $region52: #{tpu_custom_call.1} parent=43 // pred_fallthru
              _
          $region44: #{tpu_custom_call.1} parent=39 // pred_fallthru
            _
          %1130 = vnop
        $region40: #{tpu_custom_call.1} parent=31 // pred_fallthru
          _
      $region32: #{tpu_custom_call.1} parent=5 // pred_fallthru
        _
      %p1131 = scmp.le.s32.totalorder 2, %s10
      // Predicated region
      $region89: #{tpu_custom_call.1} parent=5 // pred_check
        %p1132 = pneg %p1131
      $region90: #{tpu_custom_call.1} parent=5 // pred_check_branch
        %1134 = sbr.rel (%p1132) target = $region92
      $region91: #{tpu_custom_call.1} parent=5 // pred_region
        %s1135 = ssub.s32 %s10, 2
        // Predicated region
        $region93: #{tpu_custom_call.1} parent=91 // pred_check
          %p1136 = pneg %p107
        $region94: #{tpu_custom_call.1} parent=91 // pred_check_branch
          %1138 = sbr.rel (%p1136) target = $region96
        $region95: #{tpu_custom_call.1} parent=91 // pred_region
          %s1139 = sand.u32 %s92, 1
          %s1140 = sand.u32 %s92, 1
          %s1141 = smul.addr %s1140, 128
          %s1142 = scalar_lea.vmem [#allocation4], %s1141
        $region96: #{tpu_custom_call.1} parent=91 // pred_fallthru
          _
      $region92: #{tpu_custom_call.1} parent=5 // pred_fallthru
        _
    $region6: #{tpu_custom_call.1} parent=1 // loop_footer
      %s14 = sadd.s32 1, %s10
    $region7: #{tpu_custom_call.1} parent=1 // loop_footer_branch
      %9 = sbr.rel target = $region3
    $region8: #{tpu_custom_call.1} parent=1 // loop_exit
      _
    %1143 = vsyncpa [#allocation3], 1
    %s1144 = scalar_lea.sflag [#allocation3], 1
    %1145 = vsyncpa %s1144, 1

</llo_original>
